<compile_context>
chip_gen: v5e
topology: v5e:2x2
jax: 0.10.0
libtpu: 0.0.40
codegen_flags: <defaults>
</compile_context>

<pallas_src>
import functools

import jax
import jax.numpy as jnp
from jax.experimental import pallas as pl
from jax.experimental.pallas import tpu as pltpu


def _decoder_kernel(x_ref, h0_ref, wih_ref, whh_ref, b_ref,
                    w2_ref, b2_ref, w3_ref, b3_ref,
                    out_ref, xproj_sc, hid_sc, *, hidden, batch, seq):
    T, B, H = seq, batch, hidden

    # Hoisted input projection: a single well-shaped (T*B, E) x (E, 4H) MXU call,
    # bias added once (no per-step broadcast_in_dim).
    xproj_sc[...] = (
        jnp.dot(x_ref[...], wih_ref[...], preferred_element_type=jnp.float32)
        + b_ref[...])

    whh = whh_ref[...]                        # (H, 4H) bf16, resident across steps
    h = h0_ref[...]                           # (B, H) f32: pooled context -> h0
    c = jnp.zeros((B, H), jnp.float32)        # matches torch.zeros(1, B, H)

    # Recurrence, fully unrolled (T is a static compile-time constant): per step only
    # one small MXU matmul sits on the serial critical path.
    for t in range(T):
        r0, r1 = t * B, (t + 1) * B
        gates = xproj_sc[r0:r1, :] + jnp.dot(
            h.astype(jnp.bfloat16), whh, preferred_element_type=jnp.float32)  # (B, 4H) f32
        # Full-width transcendentals on the whole (B, 4H) tile; slice afterwards.
        sig = jax.nn.sigmoid(gates)
        th = jnp.tanh(gates)
        # PyTorch LSTM gate order: input, forget, cell(g), output.
        i = sig[:, 0 * H:1 * H]
        f = sig[:, 1 * H:2 * H]
        g = th[:, 2 * H:3 * H]
        o = sig[:, 3 * H:4 * H]
        c = f * c + i * g
        h = o * jnp.tanh(c)
        hid_sc[r0:r1, :] = h                  # static-index store into flat scratch

    # TODO(synk): nn.Dropout(0.5) is identity here (eval/inference semantics).
    hid = hid_sc[...].astype(jnp.bfloat16)                                     # (T*B, H)
    z = jnp.dot(hid, w2_ref[...], preferred_element_type=jnp.float32) + b2_ref[...]
    z = jnp.maximum(z, 0.0)                                                    # ReLU
    logits = jnp.dot(z.astype(jnp.bfloat16), w3_ref[...],
                     preferred_element_type=jnp.float32) + b3_ref[...]
    out_ref[...] = logits                     # (T*B, V_pad): lane-dense, unmasked stores


def chexnet1_forward(token_ids, context, params):
    """token_ids: (B, T) int32, context: (B, 2H) f32 -> logits (B, T, V) f32."""
    B, T = token_ids.shape
    H = params["w_hh"].shape[1]
    V, E = params["embed"].shape
    V_pad = pl.cdiv(V, 128) * 128

    # Embedding lookup (gather) stays in plain JAX glue; time-major flat rows so row
    # t*B + b is (time t, batch b). MXU operands go in as bf16, accumulate in f32.
    x = params["embed"][token_ids]                              # (B, T, E)
    x = jnp.transpose(x, (1, 0, 2)).reshape(T * B, E).astype(jnp.bfloat16)

    # MaxPool1d(kernel_size=2, stride=2) over the context feature dim, done in the wrapper.
    h0 = context.reshape(B, H, 2).max(-1).astype(jnp.float32)   # (B, H)

    wih_t = params["w_ih"].T.astype(jnp.bfloat16)               # (E, 4H)
    whh_t = params["w_hh"].T.astype(jnp.bfloat16)               # (H, 4H)
    b = (params["b_ih"] + params["b_hh"]).reshape(1, 4 * H).astype(jnp.float32)
    w2_t = params["w2"].T.astype(jnp.bfloat16)                  # (H, H)
    b2 = params["b2"].reshape(1, H).astype(jnp.float32)
    # Zero-pad the vocab dim to a multiple of 128 so the output slab is lane-dense.
    w3_t = jnp.zeros((H, V_pad), jnp.bfloat16).at[:, :V].set(
        params["w3"].T.astype(jnp.bfloat16))                    # (H, V_pad)
    b3 = jnp.zeros((1, V_pad), jnp.float32).at[:, :V].set(
        params["b3"].reshape(1, V).astype(jnp.float32))         # (1, V_pad)

    vmem = pl.BlockSpec(memory_space=pltpu.MemorySpace.VMEM)
    out = pl.pallas_call(
        functools.partial(_decoder_kernel, hidden=H, batch=B, seq=T),
        out_shape=jax.ShapeDtypeStruct((T * B, V_pad), jnp.float32),
        in_specs=[vmem] * 9,
        out_specs=vmem,
        scratch_shapes=[pltpu.VMEM((T * B, 4 * H), jnp.float32),   # hoisted x-projection
                        pltpu.VMEM((T * B, H), jnp.float32)],      # flat hidden states
        compiler_params=pltpu.CompilerParams(
            vmem_limit_bytes=32 * 1024 * 1024),
    )(x, h0, wih_t, whh_t, b, w2_t, b2, w3_t, b3)

    out = out[:, :V].reshape(T, B, V)                           # drop vocab padding
    return jnp.transpose(out, (1, 0, 2))                        # (B, T, V) batch-first


def _reference_forward(token_ids, context, p):
    """Pure-JAX f32 reference mirroring CheXNetDecoder1.forward (eval mode)."""
    B, T = token_ids.shape
    H = p["w_hh"].shape[1]
    ctx = context.reshape(B, H, 2).max(-1)         # MaxPool1d(2, 2)
    h = ctx.astype(jnp.float32)
    c = jnp.zeros((B, H), jnp.float32)
    emb = p["embed"][token_ids]                    # (B, T, E)

    def step(carry, x_t):
        h, c = carry
        gates = x_t @ p["w_ih"].T + p["b_ih"] + h @ p["w_hh"].T + p["b_hh"]
        i, f, g, o = jnp.split(gates, 4, axis=-1)
        i, f, o = jax.nn.sigmoid(i), jax.nn.sigmoid(f), jax.nn.sigmoid(o)
        g = jnp.tanh(g)
        c = f * c + i * g
        h = o * jnp.tanh(c)
        return (h, c), h

    (_, _), hs = jax.lax.scan(step, (h, c), jnp.transpose(emb, (1, 0, 2)))
    hs = jnp.transpose(hs, (1, 0, 2))              # (B, T, H)
    z = jax.nn.relu(hs @ p["w2"].T + p["b2"])
    return z @ p["w3"].T + p["b3"]


if __name__ == "__main__":
    # Small, module-consistent shapes:
    #   vocab V=64, embedding E=16, hidden H=32, batch B=2, seq T=8,
    #   context feature dim = 2H = 64 (pooled to H by MaxPool1d(2,2)).
    V, E, H, B, T = 64, 16, 32, 2, 8

    key = jax.random.PRNGKey(0)
    ks = jax.random.split(key, 12)
    params = {
        "embed": 0.1 * jax.random.normal(ks[0], (V, E), jnp.float32),
        "w_ih": 0.1 * jax.random.normal(ks[1], (4 * H, E), jnp.float32),
        "w_hh": 0.1 * jax.random.normal(ks[2], (4 * H, H), jnp.float32),
        "b_ih": 0.1 * jax.random.normal(ks[3], (4 * H,), jnp.float32),
        "b_hh": 0.1 * jax.random.normal(ks[4], (4 * H,), jnp.float32),
        "w2": 0.1 * jax.random.normal(ks[5], (H, H), jnp.float32),
        "b2": 0.1 * jax.random.normal(ks[6], (H,), jnp.float32),
        "w3": 0.1 * jax.random.normal(ks[7], (V, H), jnp.float32),
        "b3": 0.1 * jax.random.normal(ks[8], (V,), jnp.float32),
    }

    token_ids = jax.random.randint(ks[9], (B, T), 0, V, dtype=jnp.int32)
    context = jax.random.normal(ks[10], (B, 2 * H), jnp.float32)

    out = chexnet1_forward(token_ids, context, params)
    out = jax.block_until_ready(out)

    ref = _reference_forward(token_ids, context, params)
    assert out.shape == (B, T, V), out.shape
    # Tolerance accounts for bf16 MXU operands (f32 accumulation) vs the f32 reference.
    assert jnp.allclose(out, ref, atol=5e-3, rtol=5e-3), float(jnp.max(jnp.abs(out - ref)))

    print("KERNEL_OK")
</pallas_src>

<mosaic_0001>
module attributes {stable_mosaic.version = 11 : i64} {
  func.func @_decoder_kernel(%arg0: memref<16x16xbf16, #tpu.memory_space<vmem>>, %arg1: memref<2x32xf32, #tpu.memory_space<vmem>>, %arg2: memref<16x128xbf16, #tpu.memory_space<vmem>>, %arg3: memref<32x128xbf16, #tpu.memory_space<vmem>>, %arg4: memref<1x128xf32, #tpu.memory_space<vmem>>, %arg5: memref<32x32xbf16, #tpu.memory_space<vmem>>, %arg6: memref<1x32xf32, #tpu.memory_space<vmem>>, %arg7: memref<32x128xbf16, #tpu.memory_space<vmem>>, %arg8: memref<1x128xf32, #tpu.memory_space<vmem>>, %arg9: memref<16x128xf32, #tpu.memory_space<vmem>>, %arg10: memref<16x128xf32, #tpu.memory_space<vmem>>, %arg11: memref<16x32xf32, #tpu.memory_space<vmem>>) attributes {dimension_semantics = [], scalar_prefetch = 0 : i64, scratch_operands = 2 : i64, tpu.core_type = #tpu.core_type<tc>} {
    %c0 = arith.constant 0 : index
    %c0_0 = arith.constant 0 : index
    %0 = vector.load %arg0[%c0, %c0_0] : memref<16x16xbf16, #tpu.memory_space<vmem>>, vector<16x16xbf16>
    %c0_1 = arith.constant 0 : index
    %c0_2 = arith.constant 0 : index
    %1 = vector.load %arg2[%c0_1, %c0_2] : memref<16x128xbf16, #tpu.memory_space<vmem>>, vector<16x128xbf16>
    %cst = arith.constant dense<0.000000e+00> : vector<16x128xf32>
    %2 = tpu.matmul %0, %1, %cst {dimension_numbers = #tpu.dot_dimension_numbers<[1], [0], [0], [1], [0, 0, 1, 1], [], []>} : vector<16x16xbf16>, vector<16x128xbf16>, vector<16x128xf32> -> vector<16x128xf32>
    %c0_3 = arith.constant 0 : index
    %c0_4 = arith.constant 0 : index
    %3 = vector.load %arg4[%c0_3, %c0_4] : memref<1x128xf32, #tpu.memory_space<vmem>>, vector<1x128xf32>
    %4 = vector.broadcast %3 : vector<1x128xf32> to vector<16x128xf32>
    %5 = arith.addf %2, %4 : vector<16x128xf32>
    %c0_5 = arith.constant 0 : index
    %c0_6 = arith.constant 0 : index
    %6 = vector.load %arg10[%c0_5, %c0_6] : memref<16x128xf32, #tpu.memory_space<vmem>>, vector<16x128xf32>
    tpu.vector_store %arg10[%c0_5, %c0_6], %5 {strides = array<i32>} : memref<16x128xf32, #tpu.memory_space<vmem>>, vector<16x128xf32>,
    %c0_7 = arith.constant 0 : index
    %c0_8 = arith.constant 0 : index
    %7 = vector.load %arg3[%c0_7, %c0_8] : memref<32x128xbf16, #tpu.memory_space<vmem>>, vector<32x128xbf16>
    %c0_9 = arith.constant 0 : index
    %c0_10 = arith.constant 0 : index
    %8 = vector.load %arg1[%c0_9, %c0_10] : memref<2x32xf32, #tpu.memory_space<vmem>>, vector<2x32xf32>
    %cst_11 = arith.constant 0.000000e+00 : f32
    %9 = vector.broadcast %cst_11 : f32 to vector<2x32xf32>
    %c0_12 = arith.constant 0 : index
    %c0_13 = arith.constant 0 : index
    %10 = vector.load %arg10[%c0_12, %c0_13] : memref<16x128xf32, #tpu.memory_space<vmem>>, vector<2x128xf32>
    %11 = arith.truncf %8 : vector<2x32xf32> to vector<2x32xbf16>
    %cst_14 = arith.constant dense<0.000000e+00> : vector<2x128xf32>
    %12 = tpu.matmul %11, %7, %cst_14 {dimension_numbers = #tpu.dot_dimension_numbers<[1], [0], [0], [1], [0, 0, 1, 1], [], []>} : vector<2x32xbf16>, vector<32x128xbf16>, vector<2x128xf32> -> vector<2x128xf32>
    %13 = arith.addf %10, %12 : vector<2x128xf32>
    %14 = arith.negf %13 : vector<2x128xf32>
    %15 = math.exp %14 : vector<2x128xf32>
    %cst_15 = arith.constant 1.000000e+00 : f32
    %16 = vector.broadcast %cst_15 : f32 to vector<2x128xf32>
    %17 = arith.addf %16, %15 : vector<2x128xf32>
    %18 = arith.divf %16, %17 : vector<2x128xf32>
    %19 = math.tanh %13 : vector<2x128xf32>
    %20 = vector.extract_strided_slice %18 {offsets = [0, 0], sizes = [2, 32], strides = [1, 1]} : vector<2x128xf32> to vector<2x32xf32>
    %21 = vector.extract_strided_slice %18 {offsets = [0, 32], sizes = [2, 32], strides = [1, 1]} : vector<2x128xf32> to vector<2x32xf32>
    %22 = vector.extract_strided_slice %19 {offsets = [0, 64], sizes = [2, 32], strides = [1, 1]} : vector<2x128xf32> to vector<2x32xf32>
    %23 = vector.extract_strided_slice %18 {offsets = [0, 96], sizes = [2, 32], strides = [1, 1]} : vector<2x128xf32> to vector<2x32xf32>
    %24 = arith.mulf %21, %9 : vector<2x32xf32>
    %25 = arith.mulf %20, %22 : vector<2x32xf32>
    %26 = arith.addf %24, %25 : vector<2x32xf32>
    %27 = math.tanh %26 : vector<2x32xf32>
    %28 = arith.mulf %23, %27 : vector<2x32xf32>
    %c0_16 = arith.constant 0 : index
    %c0_17 = arith.constant 0 : index
    %29 = vector.load %arg11[%c0_16, %c0_17] : memref<16x32xf32, #tpu.memory_space<vmem>>, vector<2x32xf32>
    tpu.vector_store %arg11[%c0_16, %c0_17], %28 {strides = array<i32>} : memref<16x32xf32, #tpu.memory_space<vmem>>, vector<2x32xf32>,
    %c2 = arith.constant 2 : index
    %c0_18 = arith.constant 0 : index
    %30 = vector.load %arg10[%c2, %c0_18] : memref<16x128xf32, #tpu.memory_space<vmem>>, vector<2x128xf32>
    %31 = arith.truncf %28 : vector<2x32xf32> to vector<2x32xbf16>
    %cst_19 = arith.constant dense<0.000000e+00> : vector<2x128xf32>
    %32 = tpu.matmul %31, %7, %cst_19 {dimension_numbers = #tpu.dot_dimension_numbers<[1], [0], [0], [1], [0, 0, 1, 1], [], []>} : vector<2x32xbf16>, vector<32x128xbf16>, vector<2x128xf32> -> vector<2x128xf32>
    %33 = arith.addf %30, %32 : vector<2x128xf32>
    %34 = arith.negf %33 : vector<2x128xf32>
    %35 = math.exp %34 : vector<2x128xf32>
    %cst_20 = arith.constant 1.000000e+00 : f32
    %36 = vector.broadcast %cst_20 : f32 to vector<2x128xf32>
    %37 = arith.addf %36, %35 : vector<2x128xf32>
    %38 = arith.divf %36, %37 : vector<2x128xf32>
    %39 = math.tanh %33 : vector<2x128xf32>
    %40 = vector.extract_strided_slice %38 {offsets = [0, 0], sizes = [2, 32], strides = [1, 1]} : vector<2x128xf32> to vector<2x32xf32>
    %41 = vector.extract_strided_slice %38 {offsets = [0, 32], sizes = [2, 32], strides = [1, 1]} : vector<2x128xf32> to vector<2x32xf32>
    %42 = vector.extract_strided_slice %39 {offsets = [0, 64], sizes = [2, 32], strides = [1, 1]} : vector<2x128xf32> to vector<2x32xf32>
    %43 = vector.extract_strided_slice %38 {offsets = [0, 96], sizes = [2, 32], strides = [1, 1]} : vector<2x128xf32> to vector<2x32xf32>
    %44 = arith.mulf %41, %26 : vector<2x32xf32>
    %45 = arith.mulf %40, %42 : vector<2x32xf32>
    %46 = arith.addf %44, %45 : vector<2x32xf32>
    %47 = math.tanh %46 : vector<2x32xf32>
    %48 = arith.mulf %43, %47 : vector<2x32xf32>
    %c2_21 = arith.constant 2 : index
    %c0_22 = arith.constant 0 : index
    %49 = vector.load %arg11[%c2_21, %c0_22] : memref<16x32xf32, #tpu.memory_space<vmem>>, vector<2x32xf32>
    tpu.vector_store %arg11[%c2_21, %c0_22], %48 {strides = array<i32>} : memref<16x32xf32, #tpu.memory_space<vmem>>, vector<2x32xf32>,
    %c4 = arith.constant 4 : index
    %c0_23 = arith.constant 0 : index
    %50 = vector.load %arg10[%c4, %c0_23] : memref<16x128xf32, #tpu.memory_space<vmem>>, vector<2x128xf32>
    %51 = arith.truncf %48 : vector<2x32xf32> to vector<2x32xbf16>
    %cst_24 = arith.constant dense<0.000000e+00> : vector<2x128xf32>
    %52 = tpu.matmul %51, %7, %cst_24 {dimension_numbers = #tpu.dot_dimension_numbers<[1], [0], [0], [1], [0, 0, 1, 1], [], []>} : vector<2x32xbf16>, vector<32x128xbf16>, vector<2x128xf32> -> vector<2x128xf32>
    %53 = arith.addf %50, %52 : vector<2x128xf32>
    %54 = arith.negf %53 : vector<2x128xf32>
    %55 = math.exp %54 : vector<2x128xf32>
    %cst_25 = arith.constant 1.000000e+00 : f32
    %56 = vector.broadcast %cst_25 : f32 to vector<2x128xf32>
    %57 = arith.addf %56, %55 : vector<2x128xf32>
    %58 = arith.divf %56, %57 : vector<2x128xf32>
    %59 = math.tanh %53 : vector<2x128xf32>
    %60 = vector.extract_strided_slice %58 {offsets = [0, 0], sizes = [2, 32], strides = [1, 1]} : vector<2x128xf32> to vector<2x32xf32>
    %61 = vector.extract_strided_slice %58 {offsets = [0, 32], sizes = [2, 32], strides = [1, 1]} : vector<2x128xf32> to vector<2x32xf32>
    %62 = vector.extract_strided_slice %59 {offsets = [0, 64], sizes = [2, 32], strides = [1, 1]} : vector<2x128xf32> to vector<2x32xf32>
    %63 = vector.extract_strided_slice %58 {offsets = [0, 96], sizes = [2, 32], strides = [1, 1]} : vector<2x128xf32> to vector<2x32xf32>
    %64 = arith.mulf %61, %46 : vector<2x32xf32>
    %65 = arith.mulf %60, %62 : vector<2x32xf32>
    %66 = arith.addf %64, %65 : vector<2x32xf32>
    %67 = math.tanh %66 : vector<2x32xf32>
    %68 = arith.mulf %63, %67 : vector<2x32xf32>
    %c4_26 = arith.constant 4 : index
    %c0_27 = arith.constant 0 : index
    %69 = vector.load %arg11[%c4_26, %c0_27] : memref<16x32xf32, #tpu.memory_space<vmem>>, vector<2x32xf32>
    tpu.vector_store %arg11[%c4_26, %c0_27], %68 {strides = array<i32>} : memref<16x32xf32, #tpu.memory_space<vmem>>, vector<2x32xf32>,
    %c6 = arith.constant 6 : index
    %c0_28 = arith.constant 0 : index
    %70 = vector.load %arg10[%c6, %c0_28] : memref<16x128xf32, #tpu.memory_space<vmem>>, vector<2x128xf32>
    %71 = arith.truncf %68 : vector<2x32xf32> to vector<2x32xbf16>
    %cst_29 = arith.constant dense<0.000000e+00> : vector<2x128xf32>
    %72 = tpu.matmul %71, %7, %cst_29 {dimension_numbers = #tpu.dot_dimension_numbers<[1], [0], [0], [1], [0, 0, 1, 1], [], []>} : vector<2x32xbf16>, vector<32x128xbf16>, vector<2x128xf32> -> vector<2x128xf32>
    %73 = arith.addf %70, %72 : vector<2x128xf32>
    %74 = arith.negf %73 : vector<2x128xf32>
    %75 = math.exp %74 : vector<2x128xf32>
    %cst_30 = arith.constant 1.000000e+00 : f32
    %76 = vector.broadcast %cst_30 : f32 to vector<2x128xf32>
    %77 = arith.addf %76, %75 : vector<2x128xf32>
    %78 = arith.divf %76, %77 : vector<2x128xf32>
    %79 = math.tanh %73 : vector<2x128xf32>
    %80 = vector.extract_strided_slice %78 {offsets = [0, 0], sizes = [2, 32], strides = [1, 1]} : vector<2x128xf32> to vector<2x32xf32>
    %81 = vector.extract_strided_slice %78 {offsets = [0, 32], sizes = [2, 32], strides = [1, 1]} : vector<2x128xf32> to vector<2x32xf32>
    %82 = vector.extract_strided_slice %79 {offsets = [0, 64], sizes = [2, 32], strides = [1, 1]} : vector<2x128xf32> to vector<2x32xf32>
    %83 = vector.extract_strided_slice %78 {offsets = [0, 96], sizes = [2, 32], strides = [1, 1]} : vector<2x128xf32> to vector<2x32xf32>
    %84 = arith.mulf %81, %66 : vector<2x32xf32>
    %85 = arith.mulf %80, %82 : vector<2x32xf32>
    %86 = arith.addf %84, %85 : vector<2x32xf32>
    %87 = math.tanh %86 : vector<2x32xf32>
    %88 = arith.mulf %83, %87 : vector<2x32xf32>
    %c6_31 = arith.constant 6 : index
    %c0_32 = arith.constant 0 : index
    %89 = vector.load %arg11[%c6_31, %c0_32] : memref<16x32xf32, #tpu.memory_space<vmem>>, vector<2x32xf32>
    tpu.vector_store %arg11[%c6_31, %c0_32], %88 {strides = array<i32>} : memref<16x32xf32, #tpu.memory_space<vmem>>, vector<2x32xf32>,
    %c8 = arith.constant 8 : index
    %c0_33 = arith.constant 0 : index
    %90 = vector.load %arg10[%c8, %c0_33] : memref<16x128xf32, #tpu.memory_space<vmem>>, vector<2x128xf32>
    %91 = arith.truncf %88 : vector<2x32xf32> to vector<2x32xbf16>
    %cst_34 = arith.constant dense<0.000000e+00> : vector<2x128xf32>
    %92 = tpu.matmul %91, %7, %cst_34 {dimension_numbers = #tpu.dot_dimension_numbers<[1], [0], [0], [1], [0, 0, 1, 1], [], []>} : vector<2x32xbf16>, vector<32x128xbf16>, vector<2x128xf32> -> vector<2x128xf32>
    %93 = arith.addf %90, %92 : vector<2x128xf32>
    %94 = arith.negf %93 : vector<2x128xf32>
    %95 = math.exp %94 : vector<2x128xf32>
    %cst_35 = arith.constant 1.000000e+00 : f32
    %96 = vector.broadcast %cst_35 : f32 to vector<2x128xf32>
    %97 = arith.addf %96, %95 : vector<2x128xf32>
    %98 = arith.divf %96, %97 : vector<2x128xf32>
    %99 = math.tanh %93 : vector<2x128xf32>
    %100 = vector.extract_strided_slice %98 {offsets = [0, 0], sizes = [2, 32], strides = [1, 1]} : vector<2x128xf32> to vector<2x32xf32>
    %101 = vector.extract_strided_slice %98 {offsets = [0, 32], sizes = [2, 32], strides = [1, 1]} : vector<2x128xf32> to vector<2x32xf32>
    %102 = vector.extract_strided_slice %99 {offsets = [0, 64], sizes = [2, 32], strides = [1, 1]} : vector<2x128xf32> to vector<2x32xf32>
    %103 = vector.extract_strided_slice %98 {offsets = [0, 96], sizes = [2, 32], strides = [1, 1]} : vector<2x128xf32> to vector<2x32xf32>
    %104 = arith.mulf %101, %86 : vector<2x32xf32>
    %105 = arith.mulf %100, %102 : vector<2x32xf32>
    %106 = arith.addf %104, %105 : vector<2x32xf32>
    %107 = math.tanh %106 : vector<2x32xf32>
    %108 = arith.mulf %103, %107 : vector<2x32xf32>
    %c8_36 = arith.constant 8 : index
    %c0_37 = arith.constant 0 : index
    %109 = vector.load %arg11[%c8_36, %c0_37] : memref<16x32xf32, #tpu.memory_space<vmem>>, vector<2x32xf32>
    tpu.vector_store %arg11[%c8_36, %c0_37], %108 {strides = array<i32>} : memref<16x32xf32, #tpu.memory_space<vmem>>, vector<2x32xf32>,
    %c10 = arith.constant 10 : index
    %c0_38 = arith.constant 0 : index
    %110 = vector.load %arg10[%c10, %c0_38] : memref<16x128xf32, #tpu.memory_space<vmem>>, vector<2x128xf32>
    %111 = arith.truncf %108 : vector<2x32xf32> to vector<2x32xbf16>
    %cst_39 = arith.constant dense<0.000000e+00> : vector<2x128xf32>
    %112 = tpu.matmul %111, %7, %cst_39 {dimension_numbers = #tpu.dot_dimension_numbers<[1], [0], [0], [1], [0, 0, 1, 1], [], []>} : vector<2x32xbf16>, vector<32x128xbf16>, vector<2x128xf32> -> vector<2x128xf32>
    %113 = arith.addf %110, %112 : vector<2x128xf32>
    %114 = arith.negf %113 : vector<2x128xf32>
    %115 = math.exp %114 : vector<2x128xf32>
    %cst_40 = arith.constant 1.000000e+00 : f32
    %116 = vector.broadcast %cst_40 : f32 to vector<2x128xf32>
    %117 = arith.addf %116, %115 : vector<2x128xf32>
    %118 = arith.divf %116, %117 : vector<2x128xf32>
    %119 = math.tanh %113 : vector<2x128xf32>
    %120 = vector.extract_strided_slice %118 {offsets = [0, 0], sizes = [2, 32], strides = [1, 1]} : vector<2x128xf32> to vector<2x32xf32>
    %121 = vector.extract_strided_slice %118 {offsets = [0, 32], sizes = [2, 32], strides = [1, 1]} : vector<2x128xf32> to vector<2x32xf32>
    %122 = vector.extract_strided_slice %119 {offsets = [0, 64], sizes = [2, 32], strides = [1, 1]} : vector<2x128xf32> to vector<2x32xf32>
    %123 = vector.extract_strided_slice %118 {offsets = [0, 96], sizes = [2, 32], strides = [1, 1]} : vector<2x128xf32> to vector<2x32xf32>
    %124 = arith.mulf %121, %106 : vector<2x32xf32>
    %125 = arith.mulf %120, %122 : vector<2x32xf32>
    %126 = arith.addf %124, %125 : vector<2x32xf32>
    %127 = math.tanh %126 : vector<2x32xf32>
    %128 = arith.mulf %123, %127 : vector<2x32xf32>
    %c10_41 = arith.constant 10 : index
    %c0_42 = arith.constant 0 : index
    %129 = vector.load %arg11[%c10_41, %c0_42] : memref<16x32xf32, #tpu.memory_space<vmem>>, vector<2x32xf32>
    tpu.vector_store %arg11[%c10_41, %c0_42], %128 {strides = array<i32>} : memref<16x32xf32, #tpu.memory_space<vmem>>, vector<2x32xf32>,
    %c12 = arith.constant 12 : index
    %c0_43 = arith.constant 0 : index
    %130 = vector.load %arg10[%c12, %c0_43] : memref<16x128xf32, #tpu.memory_space<vmem>>, vector<2x128xf32>
    %131 = arith.truncf %128 : vector<2x32xf32> to vector<2x32xbf16>
    %cst_44 = arith.constant dense<0.000000e+00> : vector<2x128xf32>
    %132 = tpu.matmul %131, %7, %cst_44 {dimension_numbers = #tpu.dot_dimension_numbers<[1], [0], [0], [1], [0, 0, 1, 1], [], []>} : vector<2x32xbf16>, vector<32x128xbf16>, vector<2x128xf32> -> vector<2x128xf32>
    %133 = arith.addf %130, %132 : vector<2x128xf32>
    %134 = arith.negf %133 : vector<2x128xf32>
    %135 = math.exp %134 : vector<2x128xf32>
    %cst_45 = arith.constant 1.000000e+00 : f32
    %136 = vector.broadcast %cst_45 : f32 to vector<2x128xf32>
    %137 = arith.addf %136, %135 : vector<2x128xf32>
    %138 = arith.divf %136, %137 : vector<2x128xf32>
    %139 = math.tanh %133 : vector<2x128xf32>
    %140 = vector.extract_strided_slice %138 {offsets = [0, 0], sizes = [2, 32], strides = [1, 1]} : vector<2x128xf32> to vector<2x32xf32>
    %141 = vector.extract_strided_slice %138 {offsets = [0, 32], sizes = [2, 32], strides = [1, 1]} : vector<2x128xf32> to vector<2x32xf32>
    %142 = vector.extract_strided_slice %139 {offsets = [0, 64], sizes = [2, 32], strides = [1, 1]} : vector<2x128xf32> to vector<2x32xf32>
    %143 = vector.extract_strided_slice %138 {offsets = [0, 96], sizes = [2, 32], strides = [1, 1]} : vector<2x128xf32> to vector<2x32xf32>
    %144 = arith.mulf %141, %126 : vector<2x32xf32>
    %145 = arith.mulf %140, %142 : vector<2x32xf32>
    %146 = arith.addf %144, %145 : vector<2x32xf32>
    %147 = math.tanh %146 : vector<2x32xf32>
    %148 = arith.mulf %143, %147 : vector<2x32xf32>
    %c12_46 = arith.constant 12 : index
    %c0_47 = arith.constant 0 : index
    %149 = vector.load %arg11[%c12_46, %c0_47] : memref<16x32xf32, #tpu.memory_space<vmem>>, vector<2x32xf32>
    tpu.vector_store %arg11[%c12_46, %c0_47], %148 {strides = array<i32>} : memref<16x32xf32, #tpu.memory_space<vmem>>, vector<2x32xf32>,
    %c14 = arith.constant 14 : index
    %c0_48 = arith.constant 0 : index
    %150 = vector.load %arg10[%c14, %c0_48] : memref<16x128xf32, #tpu.memory_space<vmem>>, vector<2x128xf32>
    %151 = arith.truncf %148 : vector<2x32xf32> to vector<2x32xbf16>
    %cst_49 = arith.constant dense<0.000000e+00> : vector<2x128xf32>
    %152 = tpu.matmul %151, %7, %cst_49 {dimension_numbers = #tpu.dot_dimension_numbers<[1], [0], [0], [1], [0, 0, 1, 1], [], []>} : vector<2x32xbf16>, vector<32x128xbf16>, vector<2x128xf32> -> vector<2x128xf32>
    %153 = arith.addf %150, %152 : vector<2x128xf32>
    %154 = arith.negf %153 : vector<2x128xf32>
    %155 = math.exp %154 : vector<2x128xf32>
    %cst_50 = arith.constant 1.000000e+00 : f32
    %156 = vector.broadcast %cst_50 : f32 to vector<2x128xf32>
    %157 = arith.addf %156, %155 : vector<2x128xf32>
    %158 = arith.divf %156, %157 : vector<2x128xf32>
    %159 = math.tanh %153 : vector<2x128xf32>
    %160 = vector.extract_strided_slice %158 {offsets = [0, 0], sizes = [2, 32], strides = [1, 1]} : vector<2x128xf32> to vector<2x32xf32>
    %161 = vector.extract_strided_slice %158 {offsets = [0, 32], sizes = [2, 32], strides = [1, 1]} : vector<2x128xf32> to vector<2x32xf32>
    %162 = vector.extract_strided_slice %159 {offsets = [0, 64], sizes = [2, 32], strides = [1, 1]} : vector<2x128xf32> to vector<2x32xf32>
    %163 = vector.extract_strided_slice %158 {offsets = [0, 96], sizes = [2, 32], strides = [1, 1]} : vector<2x128xf32> to vector<2x32xf32>
    %164 = arith.mulf %161, %146 : vector<2x32xf32>
    %165 = arith.mulf %160, %162 : vector<2x32xf32>
    %166 = arith.addf %164, %165 : vector<2x32xf32>
    %167 = math.tanh %166 : vector<2x32xf32>
    %168 = arith.mulf %163, %167 : vector<2x32xf32>
    %c14_51 = arith.constant 14 : index
    %c0_52 = arith.constant 0 : index
    %169 = vector.load %arg11[%c14_51, %c0_52] : memref<16x32xf32, #tpu.memory_space<vmem>>, vector<2x32xf32>
    tpu.vector_store %arg11[%c14_51, %c0_52], %168 {strides = array<i32>} : memref<16x32xf32, #tpu.memory_space<vmem>>, vector<2x32xf32>,
    %c0_53 = arith.constant 0 : index
    %c0_54 = arith.constant 0 : index
    %170 = vector.load %arg11[%c0_53, %c0_54] : memref<16x32xf32, #tpu.memory_space<vmem>>, vector<16x32xf32>
    %171 = arith.truncf %170 : vector<16x32xf32> to vector<16x32xbf16>
    %c0_55 = arith.constant 0 : index
    %c0_56 = arith.constant 0 : index
    %172 = vector.load %arg5[%c0_55, %c0_56] : memref<32x32xbf16, #tpu.memory_space<vmem>>, vector<32x32xbf16>
    %cst_57 = arith.constant dense<0.000000e+00> : vector<16x32xf32>
    %173 = tpu.matmul %171, %172, %cst_57 {dimension_numbers = #tpu.dot_dimension_numbers<[1], [0], [0], [1], [0, 0, 1, 1], [], []>} : vector<16x32xbf16>, vector<32x32xbf16>, vector<16x32xf32> -> vector<16x32xf32>
    %c0_58 = arith.constant 0 : index
    %c0_59 = arith.constant 0 : index
    %174 = vector.load %arg6[%c0_58, %c0_59] : memref<1x32xf32, #tpu.memory_space<vmem>>, vector<1x32xf32>
    %175 = vector.broadcast %174 : vector<1x32xf32> to vector<16x32xf32>
    %176 = arith.addf %173, %175 : vector<16x32xf32>
    %cst_60 = arith.constant 0.000000e+00 : f32
    %177 = vector.broadcast %cst_60 : f32 to vector<16x32xf32>
    %178 = arith.maximumf %176, %177 : vector<16x32xf32>
    %179 = arith.truncf %178 : vector<16x32xf32> to vector<16x32xbf16>
    %c0_61 = arith.constant 0 : index
    %c0_62 = arith.constant 0 : index
    %180 = vector.load %arg7[%c0_61, %c0_62] : memref<32x128xbf16, #tpu.memory_space<vmem>>, vector<32x128xbf16>
    %cst_63 = arith.constant dense<0.000000e+00> : vector<16x128xf32>
    %181 = tpu.matmul %179, %180, %cst_63 {dimension_numbers = #tpu.dot_dimension_numbers<[1], [0], [0], [1], [0, 0, 1, 1], [], []>} : vector<16x32xbf16>, vector<32x128xbf16>, vector<16x128xf32> -> vector<16x128xf32>
    %c0_64 = arith.constant 0 : index
    %c0_65 = arith.constant 0 : index
    %182 = vector.load %arg8[%c0_64, %c0_65] : memref<1x128xf32, #tpu.memory_space<vmem>>, vector<1x128xf32>
    %183 = vector.broadcast %182 : vector<1x128xf32> to vector<16x128xf32>
    %184 = arith.addf %181, %183 : vector<16x128xf32>
    %c0_66 = arith.constant 0 : index
    %c0_67 = arith.constant 0 : index
    %185 = vector.load %arg9[%c0_66, %c0_67] : memref<16x128xf32, #tpu.memory_space<vmem>>, vector<16x128xf32>
    tpu.vector_store %arg9[%c0_66, %c0_67], %184 {strides = array<i32>} : memref<16x128xf32, #tpu.memory_space<vmem>>, vector<16x128xf32>,
    return
  }
}

</mosaic_0001>

<llo_original>
// kernel: tpu_custom_call.1
$region0: #{tpu_custom_call.1}
  #allocation0 [shape = 'u32[]', space=smem, size = 0x4, offset = 0x4, fixed_abs, tag = 'smem constant byte address 0x4 - core index']
  #allocation1 [shape = 'u32[72,128]{1,0:T(1,128)}', space=vmem, size = 0x9000, scoped, tag = 'internal scratch']
  #allocation2 [shape = 'f32[16,128]{1,0:T(8,128)}', space=vmem, size = 0x2000, scoped, tag = 'scratch operand']
  #allocation3 [shape = 'f32[16,32]{1,0:T(8,128)}', space=vmem, size = 0x2000, scoped, tag = 'scratch operand']
  %s0 = inlined_call_operand.hbm [shape: bf16[16,16], index: 0, kind: input, shape index: {}]
  %s1 = inlined_call_operand.hbm [shape: f32[2,32], index: 1, kind: input, shape index: {}]
  %s2 = inlined_call_operand.hbm [shape: bf16[16,128], index: 2, kind: input, shape index: {}]
  %s3 = inlined_call_operand.hbm [shape: bf16[32,128], index: 3, kind: input, shape index: {}]
  %s4 = inlined_call_operand.vmem [shape: f32[1,128], index: 4, kind: input, shape index: {}]
  %s5 = inlined_call_operand.hbm [shape: bf16[32,32], index: 5, kind: input, shape index: {}]
  %s6 = inlined_call_operand.vmem [shape: f32[1,32], index: 6, kind: input, shape index: {}]
  %s7 = inlined_call_operand.hbm [shape: bf16[32,128], index: 7, kind: input, shape index: {}]
  %s8 = inlined_call_operand.vmem [shape: f32[1,128], index: 8, kind: input, shape index: {}]
  %s9 = inlined_call_operand.hbm [shape: f32[16,128], index: 9, kind: output, shape index: {}]
  %s10 = sld [smem:[#allocation0]]
  $region70: #{tpu_custom_call.1} parent=0
    _
  %s12 = ssub.s32 1, %s10
  %s13 = scalar_select 0, %s12, %s10
  $region1: #{tpu_custom_call.1} parent=0
    #allocation4 [shape = 'u8[4096]{0}', space=vmem, size = 0x1000, scoped, tag = 'input window, operand 0, single buffered']
    #allocation5 [shape = 's32[1]{0}', space=sflag, size = 0x4, scoped, tag = 'scoped memory for tpu_custom_call.1']
    #allocation6 [shape = 's32[1]{0}', space=sflag, size = 0x4, scoped, tag = 'scoped memory for tpu_custom_call.1']
    #allocation7 [shape = 'u8[1024]{0}', space=vmem, size = 0x400, scoped, tag = 'input window, operand 1, single buffered']
    #allocation8 [shape = 's32[1]{0}', space=sflag, size = 0x4, scoped, tag = 'scoped memory for tpu_custom_call.1']
    #allocation9 [shape = 'u8[4096]{0}', space=vmem, size = 0x1000, scoped, tag = 'input window, operand 2, single buffered']
    #allocation10 [shape = 'u8[8192]{0}', space=vmem, size = 0x2000, scoped, tag = 'input window, operand 3, single buffered']
    #allocation11 [shape = 's32[1]{0}', space=sflag, size = 0x4, scoped, tag = 'scoped memory for tpu_custom_call.1']
    #allocation12 [shape = 'u8[8192]{0}', space=vmem, size = 0x2000, scoped, tag = 'input window, operand 5, single buffered']
    #allocation13 [shape = 'u8[8192]{0}', space=vmem, size = 0x2000, scoped, tag = 'input window, operand 7, single buffered']
    #allocation14 [shape = 's32[1]{0}', space=sflag, size = 0x4, scoped, tag = 'scoped memory for tpu_custom_call.1']
    #allocation15 [shape = 'u8[8192]{0}', space=vmem, size = 0x2000, scoped, tag = 'output window, operand 0, single buffered']
    %14 = vsyncpa [#allocation5], 0
    %15 = vsyncpa [#allocation8], 0
    %16 = vsyncpa [#allocation11], 0
    %17 = vsyncpa [#allocation14], 0
    %18 = vsyncpa [#allocation6], 0
    // Predicated region
    $region2: #{tpu_custom_call.1} parent=1 // pred_check
      _
    $region3: #{tpu_custom_call.1} parent=1 // pred_check_branch
      %20 = sbr.rel (0) target = $region5
    $region4: #{tpu_custom_call.1} parent=1 // pred_region
      %22 = vsyncadd [#allocation5], 0
      %s23 = sshll.u32 %s0, 4
      %s24 = int_to_ptr.hbm [resolvable:$true] %s23
      %s25 = sshll.u32 [#allocation4], 4
      %s26 = int_to_ptr.vmem [resolvable:$true] %s25
      %31 = dma.hbm_to_vmem [thread:$0]  %s24, 128, %s26, [#allocation5], 64, 64, 4
    $region5: #{tpu_custom_call.1} parent=1 // pred_fallthru
      _
    // Predicated region
    $region6: #{tpu_custom_call.1} parent=1 // pred_check
      _
    $region7: #{tpu_custom_call.1} parent=1 // pred_check_branch
      %33 = sbr.rel (0) target = $region9
    $region8: #{tpu_custom_call.1} parent=1 // pred_region
      %35 = vsyncadd [#allocation8], 0
      %s37 = sshll.u32 %s1, 4
      %s38 = int_to_ptr.hbm [resolvable:$true] %s37
      %s39 = sshll.u32 [#allocation7], 4
      %s40 = int_to_ptr.vmem [resolvable:$true] %s39
      %42 = dma.hbm_to_vmem [thread:$0]  %s38, 32, %s40, [#allocation8]
    $region9: #{tpu_custom_call.1} parent=1 // pred_fallthru
      _
    // Predicated region
    $region10: #{tpu_custom_call.1} parent=1 // pred_check
      _
    $region11: #{tpu_custom_call.1} parent=1 // pred_check_branch
      %44 = sbr.rel (0) target = $region13
    $region12: #{tpu_custom_call.1} parent=1 // pred_region
      %46 = vsyncadd [#allocation8], 0
      %s47 = sshll.u32 %s2, 4
      %s48 = int_to_ptr.hbm [resolvable:$true] %s47
      %s49 = sshll.u32 [#allocation9], 4
      %s50 = int_to_ptr.vmem [resolvable:$true] %s49
      %55 = dma.hbm_to_vmem [thread:$0]  %s48, 128, %s50, [#allocation8], 64, 64, 4
    $region13: #{tpu_custom_call.1} parent=1 // pred_fallthru
      _
    // Predicated region
    $region14: #{tpu_custom_call.1} parent=1 // pred_check
      _
    $region15: #{tpu_custom_call.1} parent=1 // pred_check_branch
      %57 = sbr.rel (0) target = $region17
    $region16: #{tpu_custom_call.1} parent=1 // pred_region
      %59 = vsyncadd [#allocation11], 0
      %s60 = sshll.u32 %s3, 4
      %s61 = int_to_ptr.hbm [resolvable:$true] %s60
      %s62 = sshll.u32 [#allocation10], 4
      %s63 = int_to_ptr.vmem [resolvable:$true] %s62
      %68 = dma.hbm_to_vmem [thread:$0]  %s61, 256, %s63, [#allocation11], 64, 64, 4
    $region17: #{tpu_custom_call.1} parent=1 // pred_fallthru
      _
    // Predicated region
    $region18: #{tpu_custom_call.1} parent=1 // pred_check
      _
    $region19: #{tpu_custom_call.1} parent=1 // pred_check_branch
      %70 = sbr.rel (0) target = $region21
    $region20: #{tpu_custom_call.1} parent=1 // pred_region
      _
    $region21: #{tpu_custom_call.1} parent=1 // pred_fallthru
      _
    // Predicated region
    $region22: #{tpu_custom_call.1} parent=1 // pred_check
      _
    $region23: #{tpu_custom_call.1} parent=1 // pred_check_branch
      %72 = sbr.rel (0) target = $region25
    $region24: #{tpu_custom_call.1} parent=1 // pred_region
      %74 = vsyncadd [#allocation11], 0
      %s75 = sshll.u32 %s5, 4
      %s76 = int_to_ptr.hbm [resolvable:$true] %s75
      %s77 = sshll.u32 [#allocation12], 4
      %s78 = int_to_ptr.vmem [resolvable:$true] %s77
      %83 = dma.hbm_to_vmem [thread:$0]  %s76, 256, %s78, [#allocation11], 64, 64, 4
    $region25: #{tpu_custom_call.1} parent=1 // pred_fallthru
      _
    // Predicated region
    $region26: #{tpu_custom_call.1} parent=1 // pred_check
      _
    $region27: #{tpu_custom_call.1} parent=1 // pred_check_branch
      %85 = sbr.rel (0) target = $region29
    $region28: #{tpu_custom_call.1} parent=1 // pred_region
      _
    $region29: #{tpu_custom_call.1} parent=1 // pred_fallthru
      _
    // Predicated region
    $region30: #{tpu_custom_call.1} parent=1 // pred_check
      _
    $region31: #{tpu_custom_call.1} parent=1 // pred_check_branch
      %87 = sbr.rel (0) target = $region33
    $region32: #{tpu_custom_call.1} parent=1 // pred_region
      %89 = vsyncadd [#allocation14], 0
      %s90 = sshll.u32 %s7, 4
      %s91 = int_to_ptr.hbm [resolvable:$true] %s90
      %s92 = sshll.u32 [#allocation13], 4
      %s93 = int_to_ptr.vmem [resolvable:$true] %s92
      %98 = dma.hbm_to_vmem [thread:$0]  %s91, 256, %s93, [#allocation14], 64, 64, 4
    $region33: #{tpu_custom_call.1} parent=1 // pred_fallthru
      _
    // Predicated region
    $region34: #{tpu_custom_call.1} parent=1 // pred_check
      _
    $region35: #{tpu_custom_call.1} parent=1 // pred_check_branch
      %100 = sbr.rel (0) target = $region37
    $region36: #{tpu_custom_call.1} parent=1 // pred_region
      _
    $region37: #{tpu_custom_call.1} parent=1 // pred_fallthru
      _
    // Predicated region
    $region38: #{tpu_custom_call.1} parent=1 // pred_check
      _
    $region39: #{tpu_custom_call.1} parent=1 // pred_check_branch
      %102 = sbr.rel (0) target = $region41
    $region40: #{tpu_custom_call.1} parent=1 // pred_region
      %104 = dma.done [#allocation5], 128
    $region41: #{tpu_custom_call.1} parent=1 // pred_fallthru
      _
    // Predicated region
    $region42: #{tpu_custom_call.1} parent=1 // pred_check
      _
    $region43: #{tpu_custom_call.1} parent=1 // pred_check_branch
      %106 = sbr.rel (0) target = $region45
    $region44: #{tpu_custom_call.1} parent=1 // pred_region
      %108 = dma.done [#allocation8], 32
    $region45: #{tpu_custom_call.1} parent=1 // pred_fallthru
      _
    // Predicated region
    $region46: #{tpu_custom_call.1} parent=1 // pred_check
      _
    $region47: #{tpu_custom_call.1} parent=1 // pred_check_branch
      %110 = sbr.rel (0) target = $region49
    $region48: #{tpu_custom_call.1} parent=1 // pred_region
      %112 = dma.done [#allocation8], 128
    $region49: #{tpu_custom_call.1} parent=1 // pred_fallthru
      _
    // Predicated region
    $region50: #{tpu_custom_call.1} parent=1 // pred_check
      _
    $region51: #{tpu_custom_call.1} parent=1 // pred_check_branch
      %114 = sbr.rel (0) target = $region53
    $region52: #{tpu_custom_call.1} parent=1 // pred_region
      %116 = dma.done [#allocation11], 256
    $region53: #{tpu_custom_call.1} parent=1 // pred_fallthru
      _
    // Predicated region
    $region54: #{tpu_custom_call.1} parent=1 // pred_check
      _
    $region55: #{tpu_custom_call.1} parent=1 // pred_check_branch
      %118 = sbr.rel (0) target = $region57
    $region56: #{tpu_custom_call.1} parent=1 // pred_region
      %120 = dma.done [#allocation11], 256
    $region57: #{tpu_custom_call.1} parent=1 // pred_fallthru
      _
    // Predicated region
    $region58: #{tpu_custom_call.1} parent=1 // pred_check
      _
    $region59: #{tpu_custom_call.1} parent=1 // pred_check_branch
      %122 = sbr.rel (0) target = $region61
    $region60: #{tpu_custom_call.1} parent=1 // pred_region
      %124 = dma.done [#allocation14], 256
    $region61: #{tpu_custom_call.1} parent=1 // pred_fallthru
      _
    %v126 = vld [vmem:[#allocation4] sm:$0xf]
    %v127 = vld [vmem:[#allocation4 + $0x4] sm:$0xf]
    %v128 = vld [vmem:[#allocation9] sm:$0xf]
    %v129 = vld [vmem:[#allocation9 + $0x4] sm:$0xf]
    %v130 = vld [vmem:[%s4] sm:$0x1]
    %v132 = vperm.slane %v130, 0
    %v136 = vunpack.c.l.b16 %v126
    %v137 = vunpack.c.l.b16 %v127
    %v138 = vpack.c.b16 %v137, %v136
    %v141 = vunpack.c.l.b16 %v128
    %v142 = vunpack.c.l.b16 %v129
    %v143 = vpack.c.b16 %v142, %v141
    %vm145 = vcmask 130048
    %v147 = vsel %vm145, %v138, 0
    %149 = vmatpush.bf16.msra.mxu0 0
    %150 = vmatpush.bf16.msra.mxu0 0
    %151 = vmatpush.bf16.msra.mxu0 0
    %152 = vmatpush.bf16.msra.mxu0 0
    %153 = vmatpush.bf16.msra.mxu0 0
    %154 = vmatpush.bf16.msra.mxu0 0
    %155 = vmatpush.bf16.msra.mxu0 0
    %156 = vmatpush.bf16.msra.mxu0 %v143
    %157 = vmatmul.bf16.gmra.mxu0 %v147
    %v158 = vpop.f32.mrf.mxu0
    %v159 = vadd.f32 %v132, %v158
    %v160 = vpop.f32.mrf.mxu0
    %v161 = vadd.f32 %v132, %v160
    %162 = vdwg.mxu0
    %163 = vst [vmem:[#allocation2] sm:$0xff] %v159
    %164 = vst [vmem:[#allocation2 + $0x8] sm:$0xff] %v161
    %v165 = vld [vmem:[#allocation10] sm:$0xf]
    %v166 = vld [vmem:[#allocation10 + $0x4] sm:$0xf]
    %v167 = vld [vmem:[#allocation10 + $0x8] sm:$0xf]
    %v168 = vld [vmem:[#allocation10 + $0xc] sm:$0xf]
    %v169 = vld [vmem:[#allocation7] sm:$0x3]
    %v170 = vld [vmem:[#allocation2] sm:$0x3]
    %v171 = vpack.c.bf16 %v169, %v169
    %v176 = vunpack.c.l.b16 %v165
    %v177 = vunpack.c.l.b16 %v166
    %v178 = vunpack.c.l.b16 %v167
    %v179 = vunpack.c.l.b16 %v168
    %v180 = vpack.c.b16 %v177, %v176
    %v181 = vpack.c.b16 %v179, %v178
    %vm184 = vcmask 261120
    %v186 = vsel %vm184, %v171, 0
    %188 = vmatpush.bf16.msra.mxu0 0
    %189 = vmatpush.bf16.msra.mxu0 0
    %190 = vmatpush.bf16.msra.mxu0 0
    %191 = vmatpush.bf16.msra.mxu0 0
    %192 = vmatpush.bf16.msra.mxu0 0
    %193 = vmatpush.bf16.msra.mxu0 0
    %194 = vmatpush.bf16.msra.mxu0 %v181
    %195 = vmatpush.bf16.msra.mxu0 %v180
    %196 = vmatmul.bf16.gmra.mxu0 %v186
    %v197 = vpop.f32.mrf.mxu0
    %v198 = vadd.f32 0.0, %v197
    %v199 = vpop.f32.mrf.mxu0
    %200 = vdwg.mxu0
    %v201 = vadd.f32 %v170, %v198
    %v202 = vxor.u32 %v201, 2147483648
    %v203 = vmul.f32 %v202, 1.442695
    %v204 = vpow.pop %v203
    %v205 = vadd.f32 %v204, 1.0
    %v206 = vrcp.pop %v205
    %v207 = vmul.f32 %v205, %v206
    %v208 = vsub.f32 1.0, %v207
    %v209 = vmul.f32 %v206, %v208
    %v210 = vadd.f32 %v206, %v209
    %vm211 = vweird.f32 %v205
    %vm212 = vweird.f32 %v206
    %vm213 = vmor %vm211, %vm212
    %v214 = vsel %vm213, %v206, %v210
    %v215 = vand.u32 2147483647, %v205
    %vm216 = vcmp.eq.f32.partialorder %v215, 8.507059e+37
    %v217 = vand.u32 %v205, 2147483648
    %v218 = vor.u32 1.1754944e-38, %v217
    %v219 = vsel %vm216, %v218, %v214
    %v220 = vmul.f32 1.0, %v219
    %v221 = vtanh.pop %v201
    %v222 = vmul.f32 %v220, 0.0
    %224 = vrot.lane.b32.xlu0 %v221, 64
    %v225 = vpop.permute.xlu0 %224
    %v227 = vmul.f32 %v220, %v225
    %229 = vrot.lane.b32.xlu0 %v227, 32
    %v230 = vpop.permute.xlu0 %229
    %v232 = vadd.f32 %v222, %v230
    %v233 = vtanh.pop %v232
    %235 = vrot.lane.b32.xlu0 %v233, 64
    %v236 = vpop.permute.xlu0 %235
    %v238 = vmul.f32 %v220, %v236
    %240 = vrot.lane.b32.xlu0 %v238, 32
    %v241 = vpop.permute.xlu0 %240
    %vm243 = vcmask 254976
    %244 = vst.msk [vmem:[#allocation3] sm:$0x3] %vm243, %v241
    %v245 = vld [vmem:[#allocation2 + $0x2] sm:$0x3]
    %v246 = vpack.c.bf16 %v238, %v238
    %248 = vrot.lane.b32.xlu0 %v246, 32
    %v249 = vpop.permute.xlu0 %248
    %v251 = vsel %vm184, %v249, 0
    %253 = vmatpush.bf16.msra.mxu0 0
    %254 = vmatpush.bf16.msra.mxu0 0
    %255 = vmatpush.bf16.msra.mxu0 0
    %256 = vmatpush.bf16.msra.mxu0 0
    %257 = vmatpush.bf16.msra.mxu0 0
    %258 = vmatpush.bf16.msra.mxu0 0
    %259 = vmatpush.bf16.msra.mxu0 %v181
    %260 = vmatpush.bf16.msra.mxu0 %v180
    %261 = vmatmul.bf16.gmra.mxu0 %v251
    %v262 = vpop.f32.mrf.mxu0
    %v263 = vadd.f32 0.0, %v262
    %v264 = vpop.f32.mrf.mxu0
    %265 = vdwg.mxu0
    %v266 = vadd.f32 %v245, %v263
    %v267 = vxor.u32 %v266, 2147483648
    %v268 = vmul.f32 %v267, 1.442695
    %v269 = vpow.pop %v268
    %v270 = vadd.f32 %v269, 1.0
    %v271 = vrcp.pop %v270
    %v272 = vmul.f32 %v270, %v271
    %v273 = vsub.f32 1.0, %v272
    %v274 = vmul.f32 %v271, %v273
    %v275 = vadd.f32 %v271, %v274
    %vm276 = vweird.f32 %v270
    %vm277 = vweird.f32 %v271
    %vm278 = vmor %vm276, %vm277
    %v279 = vsel %vm278, %v271, %v275
    %v280 = vand.u32 2147483647, %v270
    %vm281 = vcmp.eq.f32.partialorder %v280, 8.507059e+37
    %v282 = vand.u32 %v270, 2147483648
    %v283 = vor.u32 1.1754944e-38, %v282
    %v284 = vsel %vm281, %v283, %v279
    %v285 = vmul.f32 1.0, %v284
    %v286 = vtanh.pop %v266
    %v287 = vmul.f32 %v285, %v232
    %289 = vrot.lane.b32.xlu0 %v286, 64
    %v290 = vpop.permute.xlu0 %289
    %v292 = vmul.f32 %v285, %v290
    %294 = vrot.lane.b32.xlu0 %v292, 32
    %v295 = vpop.permute.xlu0 %294
    %v297 = vadd.f32 %v287, %v295
    %v298 = vtanh.pop %v297
    %300 = vrot.lane.b32.xlu0 %v298, 64
    %v301 = vpop.permute.xlu0 %300
    %v303 = vmul.f32 %v285, %v301
    %305 = vrot.lane.b32.xlu0 %v303, 32
    %v306 = vpop.permute.xlu0 %305
    %308 = vst.msk [vmem:[#allocation3 + $0x2] sm:$0x3] %vm243, %v306
    %v309 = vld [vmem:[#allocation2 + $0x4] sm:$0x3]
    %v310 = vpack.c.bf16 %v303, %v303
    %312 = vrot.lane.b32.xlu0 %v310, 32
    %v313 = vpop.permute.xlu0 %312
    %v315 = vsel %vm184, %v313, 0
    %317 = vmatpush.bf16.msra.mxu0 0
    %318 = vmatpush.bf16.msra.mxu0 0
    %319 = vmatpush.bf16.msra.mxu0 0
    %320 = vmatpush.bf16.msra.mxu0 0
    %321 = vmatpush.bf16.msra.mxu0 0
    %322 = vmatpush.bf16.msra.mxu0 0
    %323 = vmatpush.bf16.msra.mxu0 %v181
    %324 = vmatpush.bf16.msra.mxu0 %v180
    %325 = vmatmul.bf16.gmra.mxu0 %v315
    %v326 = vpop.f32.mrf.mxu0
    %v327 = vadd.f32 0.0, %v326
    %v328 = vpop.f32.mrf.mxu0
    %329 = vdwg.mxu0
    %v330 = vadd.f32 %v309, %v327
    %v331 = vxor.u32 %v330, 2147483648
    %v332 = vmul.f32 %v331, 1.442695
    %v333 = vpow.pop %v332
    %v334 = vadd.f32 %v333, 1.0
    %v335 = vrcp.pop %v334
    %v336 = vmul.f32 %v334, %v335
    %v337 = vsub.f32 1.0, %v336
    %v338 = vmul.f32 %v335, %v337
    %v339 = vadd.f32 %v335, %v338
    %vm340 = vweird.f32 %v334
    %vm341 = vweird.f32 %v335
    %vm342 = vmor %vm340, %vm341
    %v343 = vsel %vm342, %v335, %v339
    %v344 = vand.u32 2147483647, %v334
    %vm345 = vcmp.eq.f32.partialorder %v344, 8.507059e+37
    %v346 = vand.u32 %v334, 2147483648
    %v347 = vor.u32 1.1754944e-38, %v346
    %v348 = vsel %vm345, %v347, %v343
    %v349 = vmul.f32 1.0, %v348
    %v350 = vtanh.pop %v330
    %v351 = vmul.f32 %v349, %v297
    %353 = vrot.lane.b32.xlu0 %v350, 64
    %v354 = vpop.permute.xlu0 %353
    %v356 = vmul.f32 %v349, %v354
    %358 = vrot.lane.b32.xlu0 %v356, 32
    %v359 = vpop.permute.xlu0 %358
    %v361 = vadd.f32 %v351, %v359
    %v362 = vtanh.pop %v361
    %364 = vrot.lane.b32.xlu0 %v362, 64
    %v365 = vpop.permute.xlu0 %364
    %v367 = vmul.f32 %v349, %v365
    %369 = vrot.lane.b32.xlu0 %v367, 32
    %v370 = vpop.permute.xlu0 %369
    %372 = vst.msk [vmem:[#allocation3 + $0x4] sm:$0x3] %vm243, %v370
    %v373 = vld [vmem:[#allocation2 + $0x6] sm:$0x3]
    %v374 = vpack.c.bf16 %v367, %v367
    %376 = vrot.lane.b32.xlu0 %v374, 32
    %v377 = vpop.permute.xlu0 %376
    %v379 = vsel %vm184, %v377, 0
    %381 = vmatpush.bf16.msra.mxu0 0
    %382 = vmatpush.bf16.msra.mxu0 0
    %383 = vmatpush.bf16.msra.mxu0 0
    %384 = vmatpush.bf16.msra.mxu0 0
    %385 = vmatpush.bf16.msra.mxu0 0
    %386 = vmatpush.bf16.msra.mxu0 0
    %387 = vmatpush.bf16.msra.mxu0 %v181
    %388 = vmatpush.bf16.msra.mxu0 %v180
    %389 = vmatmul.bf16.gmra.mxu0 %v379
    %v390 = vpop.f32.mrf.mxu0
    %v391 = vadd.f32 0.0, %v390
    %v392 = vpop.f32.mrf.mxu0
    %393 = vdwg.mxu0
    %v394 = vadd.f32 %v373, %v391
    %v395 = vxor.u32 %v394, 2147483648
    %v396 = vmul.f32 %v395, 1.442695
    %v397 = vpow.pop %v396
    %v398 = vadd.f32 %v397, 1.0
    %v399 = vrcp.pop %v398
    %v400 = vmul.f32 %v398, %v399
    %v401 = vsub.f32 1.0, %v400
    %v402 = vmul.f32 %v399, %v401
    %v403 = vadd.f32 %v399, %v402
    %vm404 = vweird.f32 %v398
    %vm405 = vweird.f32 %v399
    %vm406 = vmor %vm404, %vm405
    %v407 = vsel %vm406, %v399, %v403
    %v408 = vand.u32 2147483647, %v398
    %vm409 = vcmp.eq.f32.partialorder %v408, 8.507059e+37
    %v410 = vand.u32 %v398, 2147483648
    %v411 = vor.u32 1.1754944e-38, %v410
    %v412 = vsel %vm409, %v411, %v407
    %v413 = vmul.f32 1.0, %v412
    %v414 = vtanh.pop %v394
    %v415 = vmul.f32 %v413, %v361
    %417 = vrot.lane.b32.xlu0 %v414, 64
    %v418 = vpop.permute.xlu0 %417
    %v420 = vmul.f32 %v413, %v418
    %422 = vrot.lane.b32.xlu0 %v420, 32
    %v423 = vpop.permute.xlu0 %422
    %v425 = vadd.f32 %v415, %v423
    %v426 = vtanh.pop %v425
    %428 = vrot.lane.b32.xlu0 %v426, 64
    %v429 = vpop.permute.xlu0 %428
    %v431 = vmul.f32 %v413, %v429
    %433 = vrot.lane.b32.xlu0 %v431, 32
    %v434 = vpop.permute.xlu0 %433
    %436 = vst.msk [vmem:[#allocation3 + $0x6] sm:$0x3] %vm243, %v434
    %v437 = vld [vmem:[#allocation2 + $0x8] sm:$0x3]
    %v438 = vpack.c.bf16 %v431, %v431
    %440 = vrot.lane.b32.xlu0 %v438, 32
    %v441 = vpop.permute.xlu0 %440
    %v443 = vsel %vm184, %v441, 0
    %445 = vmatpush.bf16.msra.mxu0 0
    %446 = vmatpush.bf16.msra.mxu0 0
    %447 = vmatpush.bf16.msra.mxu0 0
    %448 = vmatpush.bf16.msra.mxu0 0
    %449 = vmatpush.bf16.msra.mxu0 0
    %450 = vmatpush.bf16.msra.mxu0 0
    %451 = vmatpush.bf16.msra.mxu0 %v181
    %452 = vmatpush.bf16.msra.mxu0 %v180
    %453 = vmatmul.bf16.gmra.mxu0 %v443
    %v454 = vpop.f32.mrf.mxu0
    %v455 = vadd.f32 0.0, %v454
    %v456 = vpop.f32.mrf.mxu0
    %457 = vdwg.mxu0
    %v458 = vadd.f32 %v437, %v455
    %v459 = vxor.u32 %v458, 2147483648
    %v460 = vmul.f32 %v459, 1.442695
    %v461 = vpow.pop %v460
    %v462 = vadd.f32 %v461, 1.0
    %v463 = vrcp.pop %v462
    %v464 = vmul.f32 %v462, %v463
    %v465 = vsub.f32 1.0, %v464
    %v466 = vmul.f32 %v463, %v465
    %v467 = vadd.f32 %v463, %v466
    %vm468 = vweird.f32 %v462
    %vm469 = vweird.f32 %v463
    %vm470 = vmor %vm468, %vm469
    %v471 = vsel %vm470, %v463, %v467
    %v472 = vand.u32 2147483647, %v462
    %vm473 = vcmp.eq.f32.partialorder %v472, 8.507059e+37
    %v474 = vand.u32 %v462, 2147483648
    %v475 = vor.u32 1.1754944e-38, %v474
    %v476 = vsel %vm473, %v475, %v471
    %v477 = vmul.f32 1.0, %v476
    %v478 = vtanh.pop %v458
    %v479 = vmul.f32 %v477, %v425
    %481 = vrot.lane.b32.xlu0 %v478, 64
    %v482 = vpop.permute.xlu0 %481
    %v484 = vmul.f32 %v477, %v482
    %486 = vrot.lane.b32.xlu0 %v484, 32
    %v487 = vpop.permute.xlu0 %486
    %v489 = vadd.f32 %v479, %v487
    %v490 = vtanh.pop %v489
    %492 = vrot.lane.b32.xlu0 %v490, 64
    %v493 = vpop.permute.xlu0 %492
    %v495 = vmul.f32 %v477, %v493
    %497 = vrot.lane.b32.xlu0 %v495, 32
    %v498 = vpop.permute.xlu0 %497
    %500 = vst.msk [vmem:[#allocation3 + $0x8] sm:$0x3] %vm243, %v498
    %v501 = vld [vmem:[#allocation2 + $0xa] sm:$0x3]
    %v502 = vpack.c.bf16 %v495, %v495
    %504 = vrot.lane.b32.xlu0 %v502, 32
    %v505 = vpop.permute.xlu0 %504
    %v507 = vsel %vm184, %v505, 0
    %509 = vmatpush.bf16.msra.mxu0 0
    %510 = vmatpush.bf16.msra.mxu0 0
    %511 = vmatpush.bf16.msra.mxu0 0
    %512 = vmatpush.bf16.msra.mxu0 0
    %513 = vmatpush.bf16.msra.mxu0 0
    %514 = vmatpush.bf16.msra.mxu0 0
    %515 = vmatpush.bf16.msra.mxu0 %v181
    %516 = vmatpush.bf16.msra.mxu0 %v180
    %517 = vmatmul.bf16.gmra.mxu0 %v507
    %v518 = vpop.f32.mrf.mxu0
    %v519 = vadd.f32 0.0, %v518
    %v520 = vpop.f32.mrf.mxu0
    %521 = vdwg.mxu0
    %v522 = vadd.f32 %v501, %v519
    %v523 = vxor.u32 %v522, 2147483648
    %v524 = vmul.f32 %v523, 1.442695
    %v525 = vpow.pop %v524
    %v526 = vadd.f32 %v525, 1.0
    %v527 = vrcp.pop %v526
    %v528 = vmul.f32 %v526, %v527
    %v529 = vsub.f32 1.0, %v528
    %v530 = vmul.f32 %v527, %v529
    %v531 = vadd.f32 %v527, %v530
    %vm532 = vweird.f32 %v526
    %vm533 = vweird.f32 %v527
    %vm534 = vmor %vm532, %vm533
    %v535 = vsel %vm534, %v527, %v531
    %v536 = vand.u32 2147483647, %v526
    %vm537 = vcmp.eq.f32.partialorder %v536, 8.507059e+37
    %v538 = vand.u32 %v526, 2147483648
    %v539 = vor.u32 1.1754944e-38, %v538
    %v540 = vsel %vm537, %v539, %v535
    %v541 = vmul.f32 1.0, %v540
    %v542 = vtanh.pop %v522
    %v543 = vmul.f32 %v541, %v489
    %545 = vrot.lane.b32.xlu0 %v542, 64
    %v546 = vpop.permute.xlu0 %545
    %v548 = vmul.f32 %v541, %v546
    %550 = vrot.lane.b32.xlu0 %v548, 32
    %v551 = vpop.permute.xlu0 %550
    %v553 = vadd.f32 %v543, %v551
    %v554 = vtanh.pop %v553
    %556 = vrot.lane.b32.xlu0 %v554, 64
    %v557 = vpop.permute.xlu0 %556
    %v559 = vmul.f32 %v541, %v557
    %561 = vrot.lane.b32.xlu0 %v559, 32
    %v562 = vpop.permute.xlu0 %561
    %564 = vst.msk [vmem:[#allocation3 + $0xa] sm:$0x3] %vm243, %v562
    %v565 = vld [vmem:[#allocation2 + $0xc] sm:$0x3]
    %v566 = vpack.c.bf16 %v559, %v559
    %568 = vrot.lane.b32.xlu0 %v566, 32
    %v569 = vpop.permute.xlu0 %568
    %v571 = vsel %vm184, %v569, 0
    %573 = vmatpush.bf16.msra.mxu0 0
    %574 = vmatpush.bf16.msra.mxu0 0
    %575 = vmatpush.bf16.msra.mxu0 0
    %576 = vmatpush.bf16.msra.mxu0 0
    %577 = vmatpush.bf16.msra.mxu0 0
    %578 = vmatpush.bf16.msra.mxu0 0
    %579 = vmatpush.bf16.msra.mxu0 %v181
    %580 = vmatpush.bf16.msra.mxu0 %v180
    %581 = vmatmul.bf16.gmra.mxu0 %v571
    %v582 = vpop.f32.mrf.mxu0
    %v583 = vadd.f32 0.0, %v582
    %v584 = vpop.f32.mrf.mxu0
    %585 = vdwg.mxu0
    %v586 = vadd.f32 %v565, %v583
    %v587 = vxor.u32 %v586, 2147483648
    %v588 = vmul.f32 %v587, 1.442695
    %v589 = vpow.pop %v588
    %v590 = vadd.f32 %v589, 1.0
    %v591 = vrcp.pop %v590
    %v592 = vmul.f32 %v590, %v591
    %v593 = vsub.f32 1.0, %v592
    %v594 = vmul.f32 %v591, %v593
    %v595 = vadd.f32 %v591, %v594
    %vm596 = vweird.f32 %v590
    %vm597 = vweird.f32 %v591
    %vm598 = vmor %vm596, %vm597
    %v599 = vsel %vm598, %v591, %v595
    %v600 = vand.u32 2147483647, %v590
    %vm601 = vcmp.eq.f32.partialorder %v600, 8.507059e+37
    %v602 = vand.u32 %v590, 2147483648
    %v603 = vor.u32 1.1754944e-38, %v602
    %v604 = vsel %vm601, %v603, %v599
    %v605 = vmul.f32 1.0, %v604
    %v606 = vtanh.pop %v586
    %v607 = vmul.f32 %v605, %v553
    %609 = vrot.lane.b32.xlu0 %v606, 64
    %v610 = vpop.permute.xlu0 %609
    %v612 = vmul.f32 %v605, %v610
    %614 = vrot.lane.b32.xlu0 %v612, 32
    %v615 = vpop.permute.xlu0 %614
    %v617 = vadd.f32 %v607, %v615
    %v618 = vtanh.pop %v617
    %620 = vrot.lane.b32.xlu0 %v618, 64
    %v621 = vpop.permute.xlu0 %620
    %v623 = vmul.f32 %v605, %v621
    %625 = vrot.lane.b32.xlu0 %v623, 32
    %v626 = vpop.permute.xlu0 %625
    %628 = vst.msk [vmem:[#allocation3 + $0xc] sm:$0x3] %vm243, %v626
    %v629 = vld [vmem:[#allocation2 + $0xe] sm:$0x3]
    %v630 = vpack.c.bf16 %v623, %v623
    %632 = vrot.lane.b32.xlu0 %v630, 32
    %v633 = vpop.permute.xlu0 %632
    %v635 = vsel %vm184, %v633, 0
    %637 = vmatpush.bf16.msra.mxu0 0
    %638 = vmatpush.bf16.msra.mxu0 0
    %639 = vmatpush.bf16.msra.mxu0 0
    %640 = vmatpush.bf16.msra.mxu0 0
    %641 = vmatpush.bf16.msra.mxu0 0
    %642 = vmatpush.bf16.msra.mxu0 0
    %643 = vmatpush.bf16.msra.mxu0 %v181
    %644 = vmatpush.bf16.msra.mxu0 %v180
    %645 = vmatmul.bf16.gmra.mxu0 %v635
    %v646 = vpop.f32.mrf.mxu0
    %v647 = vadd.f32 0.0, %v646
    %v648 = vpop.f32.mrf.mxu0
    %649 = vdwg.mxu0
    %v650 = vadd.f32 %v629, %v647
    %v651 = vxor.u32 %v650, 2147483648
    %v652 = vmul.f32 %v651, 1.442695
    %v653 = vpow.pop %v652
    %v654 = vadd.f32 %v653, 1.0
    %v655 = vrcp.pop %v654
    %v656 = vmul.f32 %v654, %v655
    %v657 = vsub.f32 1.0, %v656
    %v658 = vmul.f32 %v655, %v657
    %v659 = vadd.f32 %v655, %v658
    %vm660 = vweird.f32 %v654
    %vm661 = vweird.f32 %v655
    %vm662 = vmor %vm660, %vm661
    %v663 = vsel %vm662, %v655, %v659
    %v664 = vand.u32 2147483647, %v654
    %vm665 = vcmp.eq.f32.partialorder %v664, 8.507059e+37
    %v666 = vand.u32 %v654, 2147483648
    %v667 = vor.u32 1.1754944e-38, %v666
    %v668 = vsel %vm665, %v667, %v663
    %v669 = vmul.f32 1.0, %v668
    %v670 = vtanh.pop %v650
    %v671 = vmul.f32 %v669, %v617
    %673 = vrot.lane.b32.xlu0 %v670, 64
    %v674 = vpop.permute.xlu0 %673
    %v676 = vmul.f32 %v669, %v674
    %678 = vrot.lane.b32.xlu0 %v676, 32
    %v679 = vpop.permute.xlu0 %678
    %v681 = vadd.f32 %v671, %v679
    %v682 = vtanh.pop %v681
    %684 = vrot.lane.b32.xlu0 %v682, 64
    %v685 = vpop.permute.xlu0 %684
    %v687 = vmul.f32 %v669, %v685
    %689 = vrot.lane.b32.xlu0 %v687, 32
    %v690 = vpop.permute.xlu0 %689
    %692 = vst.msk [vmem:[#allocation3 + $0xe] sm:$0x3] %vm243, %v690
    %v693 = vld [vmem:[#allocation3] sm:$0xff]
    %v694 = vld [vmem:[#allocation3 + $0x8] sm:$0xff]
    %v695 = vpack.c.bf16 %v694, %v693
    %v696 = vld [vmem:[#allocation12] sm:$0xf]
    %v697 = vld [vmem:[#allocation12 + $0x4] sm:$0xf]
    %v698 = vld [vmem:[#allocation12 + $0x8] sm:$0xf]
    %v699 = vld [vmem:[#allocation12 + $0xc] sm:$0xf]
    %v700 = vld [vmem:[%s6] sm:$0x1]
    %v702 = vperm.slane %v700, 0
    %v708 = vunpack.c.l.b16 %v696
    %v709 = vunpack.c.l.b16 %v697
    %v710 = vunpack.c.l.b16 %v698
    %v711 = vunpack.c.l.b16 %v699
    %v712 = vpack.c.b16 %v709, %v708
    %v713 = vpack.c.b16 %v711, %v710
    %v717 = vsel %vm184, %v695, 0
    %719 = vmatpush.bf16.msra.mxu0 0
    %720 = vmatpush.bf16.msra.mxu0 0
    %721 = vmatpush.bf16.msra.mxu0 0
    %722 = vmatpush.bf16.msra.mxu0 0
    %723 = vmatpush.bf16.msra.mxu0 0
    %724 = vmatpush.bf16.msra.mxu0 0
    %725 = vmatpush.bf16.msra.mxu0 %v713
    %726 = vmatpush.bf16.msra.mxu0 %v712
    %727 = vmatmul.bf16.gmra.mxu0 %v717
    %v728 = vpop.f32.mrf.mxu0
    %v729 = vadd.f32 %v702, %v728
    %v730 = vpop.f32.mrf.mxu0
    %v731 = vadd.f32 %v702, %v730
    %732 = vdwg.mxu0
    %v733 = vmax.f32 %v729, 0.0
    %v734 = vmax.f32 %v731, 0.0
    %v735 = vpack.c.bf16 %v734, %v733
    %v736 = vld [vmem:[#allocation13] sm:$0xf]
    %v737 = vld [vmem:[#allocation13 + $0x4] sm:$0xf]
    %v738 = vld [vmem:[#allocation13 + $0x8] sm:$0xf]
    %v739 = vld [vmem:[#allocation13 + $0xc] sm:$0xf]
    %v740 = vld [vmem:[%s8] sm:$0x1]
    %v742 = vperm.slane %v740, 0
    %v748 = vunpack.c.l.b16 %v736
    %v749 = vunpack.c.l.b16 %v737
    %v750 = vunpack.c.l.b16 %v738
    %v751 = vunpack.c.l.b16 %v739
    %v752 = vpack.c.b16 %v749, %v748
    %v753 = vpack.c.b16 %v751, %v750
    %v757 = vsel %vm184, %v735, 0
    %759 = vmatpush.bf16.msra.mxu0 0
    %760 = vmatpush.bf16.msra.mxu0 0
    %761 = vmatpush.bf16.msra.mxu0 0
    %762 = vmatpush.bf16.msra.mxu0 0
    %763 = vmatpush.bf16.msra.mxu0 0
    %764 = vmatpush.bf16.msra.mxu0 0
    %765 = vmatpush.bf16.msra.mxu0 %v753
    %766 = vmatpush.bf16.msra.mxu0 %v752
    %767 = vmatmul.bf16.gmra.mxu0 %v757
    %v768 = vpop.f32.mrf.mxu0
    %v769 = vadd.f32 %v742, %v768
    %v770 = vpop.f32.mrf.mxu0
    %v771 = vadd.f32 %v742, %v770
    %772 = vdwg.mxu0
    %773 = vst [vmem:[#allocation15] sm:$0xff] %v769
    %774 = vst [vmem:[#allocation15 + $0x8] sm:$0xff] %v771
    // Predicated region
    $region62: #{tpu_custom_call.1} parent=1 // pred_check
      _
    $region63: #{tpu_custom_call.1} parent=1 // pred_check_branch
      %776 = sbr.rel (0) target = $region65
    $region64: #{tpu_custom_call.1} parent=1 // pred_region
      %778 = vsyncadd [#allocation6], 0
      %s779 = sshll.u32 [#allocation15], 4
      %s780 = int_to_ptr.vmem [resolvable:$true] %s779
      %s781 = sshll.u32 %s9, 4
      %s782 = int_to_ptr.hbm [resolvable:$true] %s781
      %787 = dma.vmem_to_hbm [thread:$0]  %s780, 256, %s782, [#allocation6], 128, 128, 8
    $region65: #{tpu_custom_call.1} parent=1 // pred_fallthru
      _
    // Predicated region
    $region66: #{tpu_custom_call.1} parent=1 // pred_check
      _
    $region67: #{tpu_custom_call.1} parent=1 // pred_check_branch
      %789 = sbr.rel (0) target = $region69
    $region68: #{tpu_custom_call.1} parent=1 // pred_region
      %791 = dma.done [#allocation6], 256
    $region69: #{tpu_custom_call.1} parent=1 // pred_fallthru
      _
    %792 = vsyncpa [#allocation5], 1
    %793 = vsyncpa [#allocation8], 1
    %794 = vsyncpa [#allocation11], 1
    %795 = vsyncpa [#allocation14], 1
    %796 = vsyncpa [#allocation6], 1

</llo_original>
